<compile_context>
chip_gen: v6e
topology: v6e:2x2x1
jax: 0.10.0
libtpu: 0.0.40
codegen_flags: <defaults>
</compile_context>

<pallas_src>
import numpy as np
import jax
import jax.numpy as jnp
from jax.experimental import pallas as pl
from jax.experimental.pallas import tpu as pltpu

EPS = 1e-5  # nn.BatchNorm2d default eps


def _upsample_matrix(n_in, n_out):
    """Row-stochastic interpolation matrix for bilinear, align_corners=True."""
    U = np.zeros((n_out, n_in), np.float32)
    for i in range(n_out):
        src = i * (n_in - 1) / (n_out - 1) if n_out > 1 else 0.0
        i0 = int(np.floor(src))
        i1 = min(i0 + 1, n_in - 1)
        w1 = src - i0
        U[i, i0] += 1.0 - w1
        U[i, i1] += w1
    return U


def _make_upsample_kernel(B, Cin, H, W):
    """Separable bilinear x2 upsample (align_corners=True), fused in one kernel."""
    H2, W2 = 2 * H, 2 * W
    KB = Cin * B  # batched dim of the second (H) matmul

    def kernel(x_ref, uwt_ref, uh_ref, o_ref):
        # x_ref: (Cin*B*H, W) [order c,b,h | w], uwt: (W, W2), uh: (H2, H)
        # ---- W-upsample: one big 2D matmul, M = Cin*B*H = full sublane fill -------
        t1 = jnp.dot(x_ref[...], uwt_ref[...],
                     preferred_element_type=jnp.float32)          # (Cin*B*H, W2)
        # Leading-dim split only (minor dim untouched) -> layout no-op.
        t1r = t1.reshape(KB, H, W2)
        # ---- H-upsample: batched matmul over Cin*B.  Uh is 2 KiB; the in-VMEM
        # broadcast to (Cin*B, H2, H) is 16 KiB done once (dot_general needs the
        # batch dim on both operands) -- negligible vs the 1 MiB kron it replaces.
        uh_b = jnp.broadcast_to(uh_ref[...][None], (KB, H2, H))
        up = jnp.einsum('kph,khw->kpw', uh_b, t1r,
                        preferred_element_type=jnp.float32)       # (Cin*B, H2, W2)
        o_ref[...] = up

    return kernel


def _make_conv_bn_relu_kernel(B, Cin, Cout, H2, W2):
    """3x3 conv (pad=1) + train-mode BatchNorm + ReLU on the lane-flat layout."""
    N = H2 * W2
    BN_ = B * N  # flattened (batch, spatial) lane axis

    def kernel(up_ref, w_ref, g_ref, bt_ref, o_ref):
        # up_ref: (Cin, B*N); w_ref: (9, Cout, Cin); g/bt: (Cout, 1); o: (Cout, B*N)
        up = up_ref[...]

        # Per-lane spatial coordinates (within each batch's N block).
        jj = jax.lax.broadcasted_iota(jnp.int32, (1, BN_), 1)
        xq = jj % W2
        yp = (jj // W2) % H2

        # ---- 3x3 conv: im2col via lane rolls + boundary masks, accumulated per tap
        # with un-batched (Cout, Cin) @ (Cin, B*N) matmuls (no col scratch, no
        # broadcast weight, no masked partial stores).  A flat roll that crosses a
        # batch boundary only ever lands on positions the boundary mask zeroes out.
        acc = jnp.zeros((Cout, BN_), jnp.float32)
        for ky in range(3):
            for kx in range(3):
                dy, dx = ky - 1, kx - 1
                s = dy * W2 + dx
                shifted = pltpu.roll(up, (-s) % BN_, 1) if s != 0 else up
                valid = ((yp + dy >= 0) & (yp + dy < H2) &
                         (xq + dx >= 0) & (xq + dx < W2))
                tap = jnp.where(valid, shifted, 0.0)              # (Cin, B*N)
                acc = acc + jnp.dot(w_ref[ky * 3 + kx], tap,
                                    preferred_element_type=jnp.float32)
        # NOTE: conv bias omitted -- exactly cancelled by train-mode BN mean
        # subtraction (identical output up to fp rounding).

        # ---- BatchNorm2d (train-mode batch stats, biased var) + ReLU, one pass ----
        cnt = float(BN_)
        s1 = jnp.sum(acc, axis=1, keepdims=True)                  # (Cout, 1)
        s2 = jnp.sum(acc * acc, axis=1, keepdims=True)
        mean = s1 / cnt
        var = jnp.maximum(s2 / cnt - mean * mean, 0.0)
        scale = g_ref[...] * jax.lax.rsqrt(var + EPS)
        y = (acc - mean) * scale + bt_ref[...]
        o_ref[...] = jnp.maximum(y, 0.0)

    return kernel


def up_layer_pallas(x, weight, bias, gamma, beta):
    """x: (B, Cin, H, W) f32. weight: (Cout, Cin, 3, 3). bias/gamma/beta: (Cout,)."""
    del bias  # cancelled by train-mode BN mean subtraction (see kernel note)
    B, Cin, H, W = x.shape
    Cout = weight.shape[0]
    H2, W2 = 2 * H, 2 * W
    N = H2 * W2

    # Tiny separable operators (~4 KiB total) instead of the 1 MiB kron operator.
    uwt = jnp.asarray(_upsample_matrix(W, W2).T)   # (W, W2)
    uh = jnp.asarray(_upsample_matrix(H, H2))      # (H2, H)

    # Channel-major layout so the flattened lane axis downstream is (b, p, q):
    # x -> (Cin, B, H, W) -> (Cin*B*H, W).  (Wrapper-side layout plumbing only.)
    x1 = jnp.transpose(x, (1, 0, 2, 3)).reshape(Cin * B * H, W)

    up3 = pl.pallas_call(
        _make_upsample_kernel(B, Cin, H, W),
        out_shape=jax.ShapeDtypeStruct((Cin * B, H2, W2), jnp.float32),
        in_specs=[pl.BlockSpec(memory_space=pltpu.MemorySpace.VMEM)] * 3,
        out_specs=pl.BlockSpec(memory_space=pltpu.MemorySpace.VMEM),
    )(x1, uwt, uh)

    # Row-major contiguous -> free HBM reshape to the lane-flat conv/BN layout.
    up_flat = up3.reshape(Cin, B * N)

    # Weight as (tap=ky*3+kx, Cout, Cin): aligned leading-index slices per tap.
    w3 = jnp.transpose(weight, (2, 3, 0, 1)).reshape(9, Cout, Cin)
    g2 = gamma.reshape(Cout, 1)
    b2 = beta.reshape(Cout, 1)

    out = pl.pallas_call(
        _make_conv_bn_relu_kernel(B, Cin, Cout, H2, W2),
        out_shape=jax.ShapeDtypeStruct((Cout, B * N), jnp.float32),
        in_specs=[pl.BlockSpec(memory_space=pltpu.MemorySpace.VMEM)] * 4,
        out_specs=pl.BlockSpec(memory_space=pltpu.MemorySpace.VMEM),
    )(up_flat, w3, g2, b2)

    # Layout plumbing back to NCHW happens outside the kernels.
    return out.reshape(Cout, B, H2, W2).transpose(1, 0, 2, 3)


def up_layer_reference(x, weight, bias, gamma, beta):
    """Pure-JAX reference matching the PyTorch forward (train-mode BN)."""
    B, Cin, H, W = x.shape
    Uh = jnp.asarray(_upsample_matrix(H, 2 * H))
    Uw = jnp.asarray(_upsample_matrix(W, 2 * W))
    up = jnp.einsum('ph,bchw->bcpw', Uh, x)
    up = jnp.einsum('qw,bcpw->bcpq', Uw, up)
    conv = jax.lax.conv_general_dilated(
        up, weight, window_strides=(1, 1), padding=((1, 1), (1, 1)),
        dimension_numbers=('NCHW', 'OIHW', 'NCHW'),
    ) + bias[None, :, None, None]
    mean = conv.mean(axis=(0, 2, 3), keepdims=True)
    var = ((conv - mean) ** 2).mean(axis=(0, 2, 3), keepdims=True)
    y = gamma[None, :, None, None] * (conv - mean) * jax.lax.rsqrt(var + EPS) \
        + beta[None, :, None, None]
    return jnp.maximum(y, 0.0)


if __name__ == "__main__":
    B, Cin, Cout, H, W = 2, 4, 8, 16, 16

    key = jax.random.PRNGKey(0)
    kx, kw, kb, kg, kbt = jax.random.split(key, 5)
    x = jax.random.normal(kx, (B, Cin, H, W), jnp.float32)
    weight = jax.random.normal(kw, (Cout, Cin, 3, 3), jnp.float32) * 0.1
    bias = jax.random.normal(kb, (Cout,), jnp.float32) * 0.1
    gamma = 1.0 + 0.1 * jax.random.normal(kg, (Cout,), jnp.float32)
    beta = 0.1 * jax.random.normal(kbt, (Cout,), jnp.float32)
    # TODO(synk): BatchNorm running-stats (momentum) buffer update is training-only
    # bookkeeping that does not affect the returned tensor; it is not materialized here.

    out = jax.block_until_ready(up_layer_pallas(x, weight, bias, gamma, beta))
    ref = jax.block_until_ready(up_layer_reference(x, weight, bias, gamma, beta))

    np.testing.assert_allclose(np.asarray(out), np.asarray(ref), rtol=1e-4, atol=1e-4)
    assert out.shape == (B, Cout, 2 * H, 2 * W)
    print("KERNEL_OK")
</pallas_src>

<mosaic_0001>
module attributes {stable_mosaic.version = 11 : i64} {
  func.func @kernel(%arg0: memref<128x16xf32, #tpu.memory_space<vmem>>, %arg1: memref<16x32xf32, #tpu.memory_space<vmem>>, %arg2: memref<32x16xf32, #tpu.memory_space<vmem>>, %arg3: memref<8x32x32xf32, #tpu.memory_space<vmem>>) attributes {dimension_semantics = [], scalar_prefetch = 0 : i64, scratch_operands = 0 : i64, tpu.core_type = #tpu.core_type<tc>} {
    %c0 = arith.constant 0 : index
    %c0_0 = arith.constant 0 : index
    %0 = vector.load %arg0[%c0, %c0_0] : memref<128x16xf32, #tpu.memory_space<vmem>>, vector<128x16xf32>
    %c0_1 = arith.constant 0 : index
    %c0_2 = arith.constant 0 : index
    %1 = vector.load %arg1[%c0_1, %c0_2] : memref<16x32xf32, #tpu.memory_space<vmem>>, vector<16x32xf32>
    %cst = arith.constant dense<0.000000e+00> : vector<128x32xf32>
    %2 = tpu.matmul %0, %1, %cst {dimension_numbers = #tpu.dot_dimension_numbers<[1], [0], [0], [1], [0, 0, 1, 1], [], []>} : vector<128x16xf32>, vector<16x32xf32>, vector<128x32xf32> -> vector<128x32xf32>
    %3 = vector.shape_cast %2 : vector<128x32xf32> to vector<8x16x32xf32>
    %c0_3 = arith.constant 0 : index
    %c0_4 = arith.constant 0 : index
    %4 = vector.load %arg2[%c0_3, %c0_4] : memref<32x16xf32, #tpu.memory_space<vmem>>, vector<32x16xf32>
    %5 = vector.shape_cast %4 : vector<32x16xf32> to vector<1x32x16xf32>
    %6 = vector.shape_cast %5 : vector<1x32x16xf32> to vector<1x32x16xf32>
    %7 = vector.broadcast %6 : vector<1x32x16xf32> to vector<8x32x16xf32>
    "tpu.trace_start"() <{level = 10 : i32, message = "kph,khw->kpw"}> : () -> ()
    %cst_5 = arith.constant dense<0.000000e+00> : vector<8x32x32xf32>
    %8 = tpu.matmul %7, %3, %cst_5 {dimension_numbers = #tpu.dot_dimension_numbers<[2], [1], [1], [2], [0, 0, 0, 1, 1, 2], [0], [0]>} : vector<8x32x16xf32>, vector<8x16x32xf32>, vector<8x32x32xf32> -> vector<8x32x32xf32>
    "tpu.trace_stop"() : () -> ()
    %c0_6 = arith.constant 0 : index
    %c0_7 = arith.constant 0 : index
    %c0_8 = arith.constant 0 : index
    %9 = vector.load %arg3[%c0_6, %c0_7, %c0_8] : memref<8x32x32xf32, #tpu.memory_space<vmem>>, vector<8x32x32xf32>
    tpu.vector_store %arg3[%c0_6, %c0_7, %c0_8], %8 {strides = array<i32>} : memref<8x32x32xf32, #tpu.memory_space<vmem>>, vector<8x32x32xf32>,
    return
  }
}

</mosaic_0001>

<llo_original>
// kernel: tpu_custom_call.1
$region0: #{tpu_custom_call.1}
  #allocation0 [shape = 'u32[]', space=smem, size = 0x4, offset = 0x4, fixed_abs, tag = 'smem constant byte address 0x4 - core index']
  #allocation1 [shape = 'u32[144,128]{1,0:T(1,128)}', space=vmem, size = 0x12000, scoped, tag = 'internal scratch']
  %s0 = inlined_call_operand.vmem [shape: f32[128,16], index: 0, kind: input, shape index: {}]
  %s1 = inlined_call_operand.vmem [shape: f32[16,32], index: 1, kind: input, shape index: {}]
  %s2 = inlined_call_operand.vmem [shape: f32[32,16], index: 2, kind: input, shape index: {}]
  %s3 = inlined_call_operand.hbm [shape: f32[8,32,32], index: 3, kind: output, shape index: {}]
  %s4 = sld [smem:[#allocation0]]
  $region22: #{tpu_custom_call.1} parent=0
    _
  %s6 = ssub.s32 1, %s4
  %s7 = scalar_select 0, %s6, %s4
  $region1: #{tpu_custom_call.1} parent=0
    #allocation2 [shape = 'u8[131072]{0}', space=vmem, size = 0x20000, scoped, tag = 'output window, operand 0, single buffered']
    #allocation3 [shape = 's32[1]{0}', space=sflag, size = 0x4, scoped, tag = 'scoped memory for tpu_custom_call.1']
    %8 = vsyncpa [#allocation3], 0
    // Predicated region
    $region2: #{tpu_custom_call.1} parent=1 // pred_check
      _
    $region3: #{tpu_custom_call.1} parent=1 // pred_check_branch
      %10 = sbr.rel (0) target = $region5
    $region4: #{tpu_custom_call.1} parent=1 // pred_region
      _
    $region5: #{tpu_custom_call.1} parent=1 // pred_fallthru
      _
    // Predicated region
    $region6: #{tpu_custom_call.1} parent=1 // pred_check
      _
    $region7: #{tpu_custom_call.1} parent=1 // pred_check_branch
      %12 = sbr.rel (0) target = $region9
    $region8: #{tpu_custom_call.1} parent=1 // pred_region
      _
    $region9: #{tpu_custom_call.1} parent=1 // pred_fallthru
      _
    // Predicated region
    $region10: #{tpu_custom_call.1} parent=1 // pred_check
      _
    $region11: #{tpu_custom_call.1} parent=1 // pred_check_branch
      %14 = sbr.rel (0) target = $region13
    $region12: #{tpu_custom_call.1} parent=1 // pred_region
      _
    $region13: #{tpu_custom_call.1} parent=1 // pred_fallthru
      _
    %v15 = vld [vmem:[%s0] sm:$0xff]
    %v16 = vld [vmem:[%s0 + $0x8] sm:$0xff]
    %v17 = vld [vmem:[%s0 + $0x10] sm:$0xff]
    %v18 = vld [vmem:[%s0 + $0x18] sm:$0xff]
    %v19 = vld [vmem:[%s0 + $0x20] sm:$0xff]
    %v20 = vld [vmem:[%s0 + $0x28] sm:$0xff]
    %v21 = vld [vmem:[%s0 + $0x30] sm:$0xff]
    %v22 = vld [vmem:[%s0 + $0x38] sm:$0xff]
    %v23 = vld [vmem:[%s0 + $0x40] sm:$0xff]
    %v24 = vld [vmem:[%s0 + $0x48] sm:$0xff]
    %v25 = vld [vmem:[%s0 + $0x50] sm:$0xff]
    %v26 = vld [vmem:[%s0 + $0x58] sm:$0xff]
    %v27 = vld [vmem:[%s0 + $0x60] sm:$0xff]
    %v28 = vld [vmem:[%s0 + $0x68] sm:$0xff]
    %v29 = vld [vmem:[%s0 + $0x70] sm:$0xff]
    %v30 = vld [vmem:[%s0 + $0x78] sm:$0xff]
    %v31 = vld [vmem:[%s1] sm:$0xff]
    %v32 = vld [vmem:[%s1 + $0x8] sm:$0xff]
    %vm33 = vcmask 130048
    %v35 = vsel %vm33, %v15, 0
    %v38 = vsel %vm33, %v16, 0
    %v41 = vsel %vm33, %v17, 0
    %v44 = vsel %vm33, %v18, 0
    %v47 = vsel %vm33, %v19, 0
    %v50 = vsel %vm33, %v20, 0
    %v53 = vsel %vm33, %v21, 0
    %v56 = vsel %vm33, %v22, 0
    %v59 = vsel %vm33, %v23, 0
    %v62 = vsel %vm33, %v24, 0
    %v65 = vsel %vm33, %v25, 0
    %v68 = vsel %vm33, %v26, 0
    %v71 = vsel %vm33, %v27, 0
    %v74 = vsel %vm33, %v28, 0
    %v77 = vsel %vm33, %v29, 0
    %v80 = vsel %vm33, %v30, 0
    %82 = vmatprep.subr.mxu0 0.0
    %83 = vmatpush1.msra.mxu0 0.0
    %84 = vmatprep.subr.mxu0 0.0
    %85 = vmatpush1.msra.mxu0 0.0
    %86 = vmatprep.subr.mxu0 0.0
    %87 = vmatpush1.msra.mxu0 0.0
    %88 = vmatprep.subr.mxu0 0.0
    %89 = vmatpush1.msra.mxu0 0.0
    %90 = vmatprep.subr.mxu0 0.0
    %91 = vmatpush1.msra.mxu0 0.0
    %92 = vmatprep.subr.mxu0 0.0
    %93 = vmatpush1.msra.mxu0 0.0
    %94 = vmatprep.subr.mxu0 0.0
    %95 = vmatpush1.msra.mxu0 0.0
    %96 = vmatprep.subr.mxu0 0.0
    %97 = vmatpush1.msra.mxu0 0.0
    %98 = vmatprep.subr.mxu0 0.0
    %99 = vmatpush1.msra.mxu0 0.0
    %100 = vmatprep.subr.mxu0 0.0
    %101 = vmatpush1.msra.mxu0 0.0
    %102 = vmatprep.subr.mxu0 0.0
    %103 = vmatpush1.msra.mxu0 0.0
    %104 = vmatprep.subr.mxu0 0.0
    %105 = vmatpush1.msra.mxu0 0.0
    %106 = vmatprep.subr.mxu0 0.0
    %107 = vmatpush1.msra.mxu0 0.0
    %108 = vmatprep.subr.mxu0 0.0
    %109 = vmatpush1.msra.mxu0 0.0
    %110 = vmatprep.subr.mxu0 0.0
    %111 = vmatpush1.msra.mxu0 %v32
    %112 = vmatprep.subr.mxu0 0.0
    %113 = vmatpush1.msra.mxu0 %v31
    %114 = vmatprep.subr.mxu0 0.0
    %115 = vmatpush2.msra.mxu0 0.0
    %116 = vmatprep.subr.mxu0 0.0
    %117 = vmatpush2.msra.mxu0 0.0
    %118 = vmatprep.subr.mxu0 0.0
    %119 = vmatpush2.msra.mxu0 0.0
    %120 = vmatprep.subr.mxu0 0.0
    %121 = vmatpush2.msra.mxu0 0.0
    %122 = vmatprep.subr.mxu0 0.0
    %123 = vmatpush2.msra.mxu0 0.0
    %124 = vmatprep.subr.mxu0 0.0
    %125 = vmatpush2.msra.mxu0 0.0
    %126 = vmatprep.subr.mxu0 0.0
    %127 = vmatpush2.msra.mxu0 0.0
    %128 = vmatprep.subr.mxu0 0.0
    %129 = vmatpush2.msra.mxu0 0.0
    %130 = vmatprep.subr.mxu0 0.0
    %131 = vmatpush2.msra.mxu0 0.0
    %132 = vmatprep.subr.mxu0 0.0
    %133 = vmatpush2.msra.mxu0 0.0
    %134 = vmatprep.subr.mxu0 0.0
    %135 = vmatpush2.msra.mxu0 0.0
    %136 = vmatprep.subr.mxu0 0.0
    %137 = vmatpush2.msra.mxu0 0.0
    %138 = vmatprep.subr.mxu0 0.0
    %139 = vmatpush2.msra.mxu0 0.0
    %140 = vmatprep.subr.mxu0 0.0
    %141 = vmatpush2.msra.mxu0 0.0
    %142 = vmatprep.subr.mxu0 0.0
    %143 = vmatpush2.msra.mxu0 0.0
    %144 = vmatprep.subr.mxu0 0.0
    %145 = vmatpush2.msra.mxu0 0.0
    %146 = vmatprep.mubr.f32.mxu0 0.0
    %147 = vmatmul.mubr.f32.gmra.mxu0 %v35
    %v148 = vpop.f32.mrf.mxu0
    %v149 = vadd.f32 0.0, %v148
    %v150 = vpop.f32.mrf.mxu0
    %151 = vmatprep.mubr.f32.mxu0 0.0
    %152 = vmatmul.mubr.f32.gmra.mxu0 %v38
    %v153 = vpop.f32.mrf.mxu0
    %v154 = vadd.f32 0.0, %v153
    %v155 = vpop.f32.mrf.mxu0
    %156 = vmatprep.mubr.f32.mxu0 0.0
    %157 = vmatmul.mubr.f32.gmra.mxu0 %v41
    %v158 = vpop.f32.mrf.mxu0
    %v159 = vadd.f32 0.0, %v158
    %v160 = vpop.f32.mrf.mxu0
    %161 = vmatprep.mubr.f32.mxu0 0.0
    %162 = vmatmul.mubr.f32.gmra.mxu0 %v44
    %v163 = vpop.f32.mrf.mxu0
    %v164 = vadd.f32 0.0, %v163
    %v165 = vpop.f32.mrf.mxu0
    %166 = vmatprep.mubr.f32.mxu0 0.0
    %167 = vmatmul.mubr.f32.gmra.mxu0 %v47
    %v168 = vpop.f32.mrf.mxu0
    %v169 = vadd.f32 0.0, %v168
    %v170 = vpop.f32.mrf.mxu0
    %171 = vmatprep.mubr.f32.mxu0 0.0
    %172 = vmatmul.mubr.f32.gmra.mxu0 %v50
    %v173 = vpop.f32.mrf.mxu0
    %v174 = vadd.f32 0.0, %v173
    %v175 = vpop.f32.mrf.mxu0
    %176 = vmatprep.mubr.f32.mxu0 0.0
    %177 = vmatmul.mubr.f32.gmra.mxu0 %v53
    %v178 = vpop.f32.mrf.mxu0
    %v179 = vadd.f32 0.0, %v178
    %v180 = vpop.f32.mrf.mxu0
    %181 = vmatprep.mubr.f32.mxu0 0.0
    %182 = vmatmul.mubr.f32.gmra.mxu0 %v56
    %v183 = vpop.f32.mrf.mxu0
    %v184 = vadd.f32 0.0, %v183
    %v185 = vpop.f32.mrf.mxu0
    %186 = vmatprep.mubr.f32.mxu0 0.0
    %187 = vmatmul.mubr.f32.gmra.mxu0 %v59
    %v188 = vpop.f32.mrf.mxu0
    %v189 = vadd.f32 0.0, %v188
    %v190 = vpop.f32.mrf.mxu0
    %191 = vmatprep.mubr.f32.mxu0 0.0
    %192 = vmatmul.mubr.f32.gmra.mxu0 %v62
    %v193 = vpop.f32.mrf.mxu0
    %v194 = vadd.f32 0.0, %v193
    %v195 = vpop.f32.mrf.mxu0
    %196 = vmatprep.mubr.f32.mxu0 0.0
    %197 = vmatmul.mubr.f32.gmra.mxu0 %v65
    %v198 = vpop.f32.mrf.mxu0
    %v199 = vadd.f32 0.0, %v198
    %v200 = vpop.f32.mrf.mxu0
    %201 = vmatprep.mubr.f32.mxu0 0.0
    %202 = vmatmul.mubr.f32.gmra.mxu0 %v68
    %v203 = vpop.f32.mrf.mxu0
    %v204 = vadd.f32 0.0, %v203
    %v205 = vpop.f32.mrf.mxu0
    %206 = vmatprep.mubr.f32.mxu0 0.0
    %207 = vmatmul.mubr.f32.gmra.mxu0 %v71
    %v208 = vpop.f32.mrf.mxu0
    %v209 = vadd.f32 0.0, %v208
    %v210 = vpop.f32.mrf.mxu0
    %211 = vmatprep.mubr.f32.mxu0 0.0
    %212 = vmatmul.mubr.f32.gmra.mxu0 %v74
    %v213 = vpop.f32.mrf.mxu0
    %v214 = vadd.f32 0.0, %v213
    %v215 = vpop.f32.mrf.mxu0
    %216 = vmatprep.mubr.f32.mxu0 0.0
    %217 = vmatmul.mubr.f32.gmra.mxu0 %v77
    %v218 = vpop.f32.mrf.mxu0
    %v219 = vadd.f32 0.0, %v218
    %v220 = vpop.f32.mrf.mxu0
    %221 = vmatprep.mubr.f32.mxu0 0.0
    %222 = vmatmul.mubr.f32.gmra.mxu0 %v80
    %v223 = vpop.f32.mrf.mxu0
    %v224 = vadd.f32 0.0, %v223
    %v225 = vpop.f32.mrf.mxu0
    %226 = vdwg.mxu0
    %v227 = vld [vmem:[%s2] sm:$0xff]
    %v228 = vld [vmem:[%s2 + $0x8] sm:$0xff]
    %v229 = vld [vmem:[%s2 + $0x10] sm:$0xff]
    %v230 = vld [vmem:[%s2 + $0x18] sm:$0xff]
    %v232 = vsel %vm33, %v227, 0
    %v235 = vsel %vm33, %v228, 0
    %v238 = vsel %vm33, %v229, 0
    %v241 = vsel %vm33, %v230, 0
    %243 = vmatprep.subr.mxu0 0.0
    %244 = vmatpush1.msra.mxu0 0.0
    %245 = vmatprep.subr.mxu0 0.0
    %246 = vmatpush1.msra.mxu0 0.0
    %247 = vmatprep.subr.mxu0 0.0
    %248 = vmatpush1.msra.mxu0 0.0
    %249 = vmatprep.subr.mxu0 0.0
    %250 = vmatpush1.msra.mxu0 0.0
    %251 = vmatprep.subr.mxu0 0.0
    %252 = vmatpush1.msra.mxu0 0.0
    %253 = vmatprep.subr.mxu0 0.0
    %254 = vmatpush1.msra.mxu0 0.0
    %255 = vmatprep.subr.mxu0 0.0
    %256 = vmatpush1.msra.mxu0 0.0
    %257 = vmatprep.subr.mxu0 0.0
    %258 = vmatpush1.msra.mxu0 0.0
    %259 = vmatprep.subr.mxu0 0.0
    %260 = vmatpush1.msra.mxu0 0.0
    %261 = vmatprep.subr.mxu0 0.0
    %262 = vmatpush1.msra.mxu0 0.0
    %263 = vmatprep.subr.mxu0 0.0
    %264 = vmatpush1.msra.mxu0 0.0
    %265 = vmatprep.subr.mxu0 0.0
    %266 = vmatpush1.msra.mxu0 0.0
    %267 = vmatprep.subr.mxu0 0.0
    %268 = vmatpush1.msra.mxu0 0.0
    %269 = vmatprep.subr.mxu0 0.0
    %270 = vmatpush1.msra.mxu0 0.0
    %271 = vmatprep.subr.mxu0 0.0
    %272 = vmatpush1.msra.mxu0 %v154
    %273 = vmatprep.subr.mxu0 0.0
    %274 = vmatpush1.msra.mxu0 %v149
    %275 = vmatprep.subr.mxu0 0.0
    %276 = vmatpush2.msra.mxu0 0.0
    %277 = vmatprep.subr.mxu0 0.0
    %278 = vmatpush2.msra.mxu0 0.0
    %279 = vmatprep.subr.mxu0 0.0
    %280 = vmatpush2.msra.mxu0 0.0
    %281 = vmatprep.subr.mxu0 0.0
    %282 = vmatpush2.msra.mxu0 0.0
    %283 = vmatprep.subr.mxu0 0.0
    %284 = vmatpush2.msra.mxu0 0.0
    %285 = vmatprep.subr.mxu0 0.0
    %286 = vmatpush2.msra.mxu0 0.0
    %287 = vmatprep.subr.mxu0 0.0
    %288 = vmatpush2.msra.mxu0 0.0
    %289 = vmatprep.subr.mxu0 0.0
    %290 = vmatpush2.msra.mxu0 0.0
    %291 = vmatprep.subr.mxu0 0.0
    %292 = vmatpush2.msra.mxu0 0.0
    %293 = vmatprep.subr.mxu0 0.0
    %294 = vmatpush2.msra.mxu0 0.0
    %295 = vmatprep.subr.mxu0 0.0
    %296 = vmatpush2.msra.mxu0 0.0
    %297 = vmatprep.subr.mxu0 0.0
    %298 = vmatpush2.msra.mxu0 0.0
    %299 = vmatprep.subr.mxu0 0.0
    %300 = vmatpush2.msra.mxu0 0.0
    %301 = vmatprep.subr.mxu0 0.0
    %302 = vmatpush2.msra.mxu0 0.0
    %303 = vmatprep.subr.mxu0 0.0
    %304 = vmatpush2.msra.mxu0 0.0
    %305 = vmatprep.subr.mxu0 0.0
    %306 = vmatpush2.msra.mxu0 0.0
    %307 = vmatprep.mubr.f32.mxu0 0.0
    %308 = vmatmul.mubr.f32.gmra.mxu0 %v232
    %v309 = vpop.f32.mrf.mxu0
    %v310 = vadd.f32 0.0, %v309
    %v311 = vpop.f32.mrf.mxu0
    %312 = vmatprep.mubr.f32.mxu0 0.0
    %313 = vmatmul.mubr.f32.gmra.mxu0 %v235
    %v314 = vpop.f32.mrf.mxu0
    %v315 = vadd.f32 0.0, %v314
    %v316 = vpop.f32.mrf.mxu0
    %317 = vmatprep.mubr.f32.mxu0 0.0
    %318 = vmatmul.mubr.f32.gmra.mxu0 %v238
    %v319 = vpop.f32.mrf.mxu0
    %v320 = vadd.f32 0.0, %v319
    %v321 = vpop.f32.mrf.mxu0
    %322 = vmatprep.mubr.f32.mxu0 0.0
    %323 = vmatmul.mubr.f32.gmra.mxu0 %v241
    %v324 = vpop.f32.mrf.mxu0
    %v325 = vadd.f32 0.0, %v324
    %v326 = vpop.f32.mrf.mxu0
    %327 = vdwg.mxu0
    %328 = vmatprep.subr.mxu0 0.0
    %329 = vmatpush1.msra.mxu0 0.0
    %330 = vmatprep.subr.mxu0 0.0
    %331 = vmatpush1.msra.mxu0 0.0
    %332 = vmatprep.subr.mxu0 0.0
    %333 = vmatpush1.msra.mxu0 0.0
    %334 = vmatprep.subr.mxu0 0.0
    %335 = vmatpush1.msra.mxu0 0.0
    %336 = vmatprep.subr.mxu0 0.0
    %337 = vmatpush1.msra.mxu0 0.0
    %338 = vmatprep.subr.mxu0 0.0
    %339 = vmatpush1.msra.mxu0 0.0
    %340 = vmatprep.subr.mxu0 0.0
    %341 = vmatpush1.msra.mxu0 0.0
    %342 = vmatprep.subr.mxu0 0.0
    %343 = vmatpush1.msra.mxu0 0.0
    %344 = vmatprep.subr.mxu0 0.0
    %345 = vmatpush1.msra.mxu0 0.0
    %346 = vmatprep.subr.mxu0 0.0
    %347 = vmatpush1.msra.mxu0 0.0
    %348 = vmatprep.subr.mxu0 0.0
    %349 = vmatpush1.msra.mxu0 0.0
    %350 = vmatprep.subr.mxu0 0.0
    %351 = vmatpush1.msra.mxu0 0.0
    %352 = vmatprep.subr.mxu0 0.0
    %353 = vmatpush1.msra.mxu0 0.0
    %354 = vmatprep.subr.mxu0 0.0
    %355 = vmatpush1.msra.mxu0 0.0
    %356 = vmatprep.subr.mxu0 0.0
    %357 = vmatpush1.msra.mxu0 %v164
    %358 = vmatprep.subr.mxu0 0.0
    %359 = vmatpush1.msra.mxu0 %v159
    %360 = vmatprep.subr.mxu0 0.0
    %361 = vmatpush2.msra.mxu0 0.0
    %362 = vmatprep.subr.mxu0 0.0
    %363 = vmatpush2.msra.mxu0 0.0
    %364 = vmatprep.subr.mxu0 0.0
    %365 = vmatpush2.msra.mxu0 0.0
    %366 = vmatprep.subr.mxu0 0.0
    %367 = vmatpush2.msra.mxu0 0.0
    %368 = vmatprep.subr.mxu0 0.0
    %369 = vmatpush2.msra.mxu0 0.0
    %370 = vmatprep.subr.mxu0 0.0
    %371 = vmatpush2.msra.mxu0 0.0
    %372 = vmatprep.subr.mxu0 0.0
    %373 = vmatpush2.msra.mxu0 0.0
    %374 = vmatprep.subr.mxu0 0.0
    %375 = vmatpush2.msra.mxu0 0.0
    %376 = vmatprep.subr.mxu0 0.0
    %377 = vmatpush2.msra.mxu0 0.0
    %378 = vmatprep.subr.mxu0 0.0
    %379 = vmatpush2.msra.mxu0 0.0
    %380 = vmatprep.subr.mxu0 0.0
    %381 = vmatpush2.msra.mxu0 0.0
    %382 = vmatprep.subr.mxu0 0.0
    %383 = vmatpush2.msra.mxu0 0.0
    %384 = vmatprep.subr.mxu0 0.0
    %385 = vmatpush2.msra.mxu0 0.0
    %386 = vmatprep.subr.mxu0 0.0
    %387 = vmatpush2.msra.mxu0 0.0
    %388 = vmatprep.subr.mxu0 0.0
    %389 = vmatpush2.msra.mxu0 0.0
    %390 = vmatprep.subr.mxu0 0.0
    %391 = vmatpush2.msra.mxu0 0.0
    %392 = vmatprep.mubr.f32.mxu0 0.0
    %393 = vmatmul.mubr.f32.gmra.mxu0 %v232
    %v394 = vpop.f32.mrf.mxu0
    %v395 = vadd.f32 0.0, %v394
    %v396 = vpop.f32.mrf.mxu0
    %397 = vmatprep.mubr.f32.mxu0 0.0
    %398 = vmatmul.mubr.f32.gmra.mxu0 %v235
    %v399 = vpop.f32.mrf.mxu0
    %v400 = vadd.f32 0.0, %v399
    %v401 = vpop.f32.mrf.mxu0
    %402 = vmatprep.mubr.f32.mxu0 0.0
    %403 = vmatmul.mubr.f32.gmra.mxu0 %v238
    %v404 = vpop.f32.mrf.mxu0
    %v405 = vadd.f32 0.0, %v404
    %v406 = vpop.f32.mrf.mxu0
    %407 = vmatprep.mubr.f32.mxu0 0.0
    %408 = vmatmul.mubr.f32.gmra.mxu0 %v241
    %v409 = vpop.f32.mrf.mxu0
    %v410 = vadd.f32 0.0, %v409
    %v411 = vpop.f32.mrf.mxu0
    %412 = vdwg.mxu0
    %413 = vmatprep.subr.mxu0 0.0
    %414 = vmatpush1.msra.mxu0 0.0
    %415 = vmatprep.subr.mxu0 0.0
    %416 = vmatpush1.msra.mxu0 0.0
    %417 = vmatprep.subr.mxu0 0.0
    %418 = vmatpush1.msra.mxu0 0.0
    %419 = vmatprep.subr.mxu0 0.0
    %420 = vmatpush1.msra.mxu0 0.0
    %421 = vmatprep.subr.mxu0 0.0
    %422 = vmatpush1.msra.mxu0 0.0
    %423 = vmatprep.subr.mxu0 0.0
    %424 = vmatpush1.msra.mxu0 0.0
    %425 = vmatprep.subr.mxu0 0.0
    %426 = vmatpush1.msra.mxu0 0.0
    %427 = vmatprep.subr.mxu0 0.0
    %428 = vmatpush1.msra.mxu0 0.0
    %429 = vmatprep.subr.mxu0 0.0
    %430 = vmatpush1.msra.mxu0 0.0
    %431 = vmatprep.subr.mxu0 0.0
    %432 = vmatpush1.msra.mxu0 0.0
    %433 = vmatprep.subr.mxu0 0.0
    %434 = vmatpush1.msra.mxu0 0.0
    %435 = vmatprep.subr.mxu0 0.0
    %436 = vmatpush1.msra.mxu0 0.0
    %437 = vmatprep.subr.mxu0 0.0
    %438 = vmatpush1.msra.mxu0 0.0
    %439 = vmatprep.subr.mxu0 0.0
    %440 = vmatpush1.msra.mxu0 0.0
    %441 = vmatprep.subr.mxu0 0.0
    %442 = vmatpush1.msra.mxu0 %v174
    %443 = vmatprep.subr.mxu0 0.0
    %444 = vmatpush1.msra.mxu0 %v169
    %445 = vmatprep.subr.mxu0 0.0
    %446 = vmatpush2.msra.mxu0 0.0
    %447 = vmatprep.subr.mxu0 0.0
    %448 = vmatpush2.msra.mxu0 0.0
    %449 = vmatprep.subr.mxu0 0.0
    %450 = vmatpush2.msra.mxu0 0.0
    %451 = vmatprep.subr.mxu0 0.0
    %452 = vmatpush2.msra.mxu0 0.0
    %453 = vmatprep.subr.mxu0 0.0
    %454 = vmatpush2.msra.mxu0 0.0
    %455 = vmatprep.subr.mxu0 0.0
    %456 = vmatpush2.msra.mxu0 0.0
    %457 = vmatprep.subr.mxu0 0.0
    %458 = vmatpush2.msra.mxu0 0.0
    %459 = vmatprep.subr.mxu0 0.0
    %460 = vmatpush2.msra.mxu0 0.0
    %461 = vmatprep.subr.mxu0 0.0
    %462 = vmatpush2.msra.mxu0 0.0
    %463 = vmatprep.subr.mxu0 0.0
    %464 = vmatpush2.msra.mxu0 0.0
    %465 = vmatprep.subr.mxu0 0.0
    %466 = vmatpush2.msra.mxu0 0.0
    %467 = vmatprep.subr.mxu0 0.0
    %468 = vmatpush2.msra.mxu0 0.0
    %469 = vmatprep.subr.mxu0 0.0
    %470 = vmatpush2.msra.mxu0 0.0
    %471 = vmatprep.subr.mxu0 0.0
    %472 = vmatpush2.msra.mxu0 0.0
    %473 = vmatprep.subr.mxu0 0.0
    %474 = vmatpush2.msra.mxu0 0.0
    %475 = vmatprep.subr.mxu0 0.0
    %476 = vmatpush2.msra.mxu0 0.0
    %477 = vmatprep.mubr.f32.mxu0 0.0
    %478 = vmatmul.mubr.f32.gmra.mxu0 %v232
    %v479 = vpop.f32.mrf.mxu0
    %v480 = vadd.f32 0.0, %v479
    %v481 = vpop.f32.mrf.mxu0
    %482 = vmatprep.mubr.f32.mxu0 0.0
    %483 = vmatmul.mubr.f32.gmra.mxu0 %v235
    %v484 = vpop.f32.mrf.mxu0
    %v485 = vadd.f32 0.0, %v484
    %v486 = vpop.f32.mrf.mxu0
    %487 = vmatprep.mubr.f32.mxu0 0.0
    %488 = vmatmul.mubr.f32.gmra.mxu0 %v238
    %v489 = vpop.f32.mrf.mxu0
    %v490 = vadd.f32 0.0, %v489
    %v491 = vpop.f32.mrf.mxu0
    %492 = vmatprep.mubr.f32.mxu0 0.0
    %493 = vmatmul.mubr.f32.gmra.mxu0 %v241
    %v494 = vpop.f32.mrf.mxu0
    %v495 = vadd.f32 0.0, %v494
    %v496 = vpop.f32.mrf.mxu0
    %497 = vdwg.mxu0
    %498 = vmatprep.subr.mxu0 0.0
    %499 = vmatpush1.msra.mxu0 0.0
    %500 = vmatprep.subr.mxu0 0.0
    %501 = vmatpush1.msra.mxu0 0.0
    %502 = vmatprep.subr.mxu0 0.0
    %503 = vmatpush1.msra.mxu0 0.0
    %504 = vmatprep.subr.mxu0 0.0
    %505 = vmatpush1.msra.mxu0 0.0
    %506 = vmatprep.subr.mxu0 0.0
    %507 = vmatpush1.msra.mxu0 0.0
    %508 = vmatprep.subr.mxu0 0.0
    %509 = vmatpush1.msra.mxu0 0.0
    %510 = vmatprep.subr.mxu0 0.0
    %511 = vmatpush1.msra.mxu0 0.0
    %512 = vmatprep.subr.mxu0 0.0
    %513 = vmatpush1.msra.mxu0 0.0
    %514 = vmatprep.subr.mxu0 0.0
    %515 = vmatpush1.msra.mxu0 0.0
    %516 = vmatprep.subr.mxu0 0.0
    %517 = vmatpush1.msra.mxu0 0.0
    %518 = vmatprep.subr.mxu0 0.0
    %519 = vmatpush1.msra.mxu0 0.0
    %520 = vmatprep.subr.mxu0 0.0
    %521 = vmatpush1.msra.mxu0 0.0
    %522 = vmatprep.subr.mxu0 0.0
    %523 = vmatpush1.msra.mxu0 0.0
    %524 = vmatprep.subr.mxu0 0.0
    %525 = vmatpush1.msra.mxu0 0.0
    %526 = vmatprep.subr.mxu0 0.0
    %527 = vmatpush1.msra.mxu0 %v184
    %528 = vmatprep.subr.mxu0 0.0
    %529 = vmatpush1.msra.mxu0 %v179
    %530 = vmatprep.subr.mxu0 0.0
    %531 = vmatpush2.msra.mxu0 0.0
    %532 = vmatprep.subr.mxu0 0.0
    %533 = vmatpush2.msra.mxu0 0.0
    %534 = vmatprep.subr.mxu0 0.0
    %535 = vmatpush2.msra.mxu0 0.0
    %536 = vmatprep.subr.mxu0 0.0
    %537 = vmatpush2.msra.mxu0 0.0
    %538 = vmatprep.subr.mxu0 0.0
    %539 = vmatpush2.msra.mxu0 0.0
    %540 = vmatprep.subr.mxu0 0.0
    %541 = vmatpush2.msra.mxu0 0.0
    %542 = vmatprep.subr.mxu0 0.0
    %543 = vmatpush2.msra.mxu0 0.0
    %544 = vmatprep.subr.mxu0 0.0
    %545 = vmatpush2.msra.mxu0 0.0
    %546 = vmatprep.subr.mxu0 0.0
    %547 = vmatpush2.msra.mxu0 0.0
    %548 = vmatprep.subr.mxu0 0.0
    %549 = vmatpush2.msra.mxu0 0.0
    %550 = vmatprep.subr.mxu0 0.0
    %551 = vmatpush2.msra.mxu0 0.0
    %552 = vmatprep.subr.mxu0 0.0
    %553 = vmatpush2.msra.mxu0 0.0
    %554 = vmatprep.subr.mxu0 0.0
    %555 = vmatpush2.msra.mxu0 0.0
    %556 = vmatprep.subr.mxu0 0.0
    %557 = vmatpush2.msra.mxu0 0.0
    %558 = vmatprep.subr.mxu0 0.0
    %559 = vmatpush2.msra.mxu0 0.0
    %560 = vmatprep.subr.mxu0 0.0
    %561 = vmatpush2.msra.mxu0 0.0
    %562 = vmatprep.mubr.f32.mxu0 0.0
    %563 = vmatmul.mubr.f32.gmra.mxu0 %v232
    %v564 = vpop.f32.mrf.mxu0
    %v565 = vadd.f32 0.0, %v564
    %v566 = vpop.f32.mrf.mxu0
    %567 = vmatprep.mubr.f32.mxu0 0.0
    %568 = vmatmul.mubr.f32.gmra.mxu0 %v235
    %v569 = vpop.f32.mrf.mxu0
    %v570 = vadd.f32 0.0, %v569
    %v571 = vpop.f32.mrf.mxu0
    %572 = vmatprep.mubr.f32.mxu0 0.0
    %573 = vmatmul.mubr.f32.gmra.mxu0 %v238
    %v574 = vpop.f32.mrf.mxu0
    %v575 = vadd.f32 0.0, %v574
    %v576 = vpop.f32.mrf.mxu0
    %577 = vmatprep.mubr.f32.mxu0 0.0
    %578 = vmatmul.mubr.f32.gmra.mxu0 %v241
    %v579 = vpop.f32.mrf.mxu0
    %v580 = vadd.f32 0.0, %v579
    %v581 = vpop.f32.mrf.mxu0
    %582 = vdwg.mxu0
    %583 = vmatprep.subr.mxu0 0.0
    %584 = vmatpush1.msra.mxu0 0.0
    %585 = vmatprep.subr.mxu0 0.0
    %586 = vmatpush1.msra.mxu0 0.0
    %587 = vmatprep.subr.mxu0 0.0
    %588 = vmatpush1.msra.mxu0 0.0
    %589 = vmatprep.subr.mxu0 0.0
    %590 = vmatpush1.msra.mxu0 0.0
    %591 = vmatprep.subr.mxu0 0.0
    %592 = vmatpush1.msra.mxu0 0.0
    %593 = vmatprep.subr.mxu0 0.0
    %594 = vmatpush1.msra.mxu0 0.0
    %595 = vmatprep.subr.mxu0 0.0
    %596 = vmatpush1.msra.mxu0 0.0
    %597 = vmatprep.subr.mxu0 0.0
    %598 = vmatpush1.msra.mxu0 0.0
    %599 = vmatprep.subr.mxu0 0.0
    %600 = vmatpush1.msra.mxu0 0.0
    %601 = vmatprep.subr.mxu0 0.0
    %602 = vmatpush1.msra.mxu0 0.0
    %603 = vmatprep.subr.mxu0 0.0
    %604 = vmatpush1.msra.mxu0 0.0
    %605 = vmatprep.subr.mxu0 0.0
    %606 = vmatpush1.msra.mxu0 0.0
    %607 = vmatprep.subr.mxu0 0.0
    %608 = vmatpush1.msra.mxu0 0.0
    %609 = vmatprep.subr.mxu0 0.0
    %610 = vmatpush1.msra.mxu0 0.0
    %611 = vmatprep.subr.mxu0 0.0
    %612 = vmatpush1.msra.mxu0 %v194
    %613 = vmatprep.subr.mxu0 0.0
    %614 = vmatpush1.msra.mxu0 %v189
    %615 = vmatprep.subr.mxu0 0.0
    %616 = vmatpush2.msra.mxu0 0.0
    %617 = vmatprep.subr.mxu0 0.0
    %618 = vmatpush2.msra.mxu0 0.0
    %619 = vmatprep.subr.mxu0 0.0
    %620 = vmatpush2.msra.mxu0 0.0
    %621 = vmatprep.subr.mxu0 0.0
    %622 = vmatpush2.msra.mxu0 0.0
    %623 = vmatprep.subr.mxu0 0.0
    %624 = vmatpush2.msra.mxu0 0.0
    %625 = vmatprep.subr.mxu0 0.0
    %626 = vmatpush2.msra.mxu0 0.0
    %627 = vmatprep.subr.mxu0 0.0
    %628 = vmatpush2.msra.mxu0 0.0
    %629 = vmatprep.subr.mxu0 0.0
    %630 = vmatpush2.msra.mxu0 0.0
    %631 = vmatprep.subr.mxu0 0.0
    %632 = vmatpush2.msra.mxu0 0.0
    %633 = vmatprep.subr.mxu0 0.0
    %634 = vmatpush2.msra.mxu0 0.0
    %635 = vmatprep.subr.mxu0 0.0
    %636 = vmatpush2.msra.mxu0 0.0
    %637 = vmatprep.subr.mxu0 0.0
    %638 = vmatpush2.msra.mxu0 0.0
    %639 = vmatprep.subr.mxu0 0.0
    %640 = vmatpush2.msra.mxu0 0.0
    %641 = vmatprep.subr.mxu0 0.0
    %642 = vmatpush2.msra.mxu0 0.0
    %643 = vmatprep.subr.mxu0 0.0
    %644 = vmatpush2.msra.mxu0 0.0
    %645 = vmatprep.subr.mxu0 0.0
    %646 = vmatpush2.msra.mxu0 0.0
    %647 = vmatprep.mubr.f32.mxu0 0.0
    %648 = vmatmul.mubr.f32.gmra.mxu0 %v232
    %v649 = vpop.f32.mrf.mxu0
    %v650 = vadd.f32 0.0, %v649
    %v651 = vpop.f32.mrf.mxu0
    %652 = vmatprep.mubr.f32.mxu0 0.0
    %653 = vmatmul.mubr.f32.gmra.mxu0 %v235
    %v654 = vpop.f32.mrf.mxu0
    %v655 = vadd.f32 0.0, %v654
    %v656 = vpop.f32.mrf.mxu0
    %657 = vmatprep.mubr.f32.mxu0 0.0
    %658 = vmatmul.mubr.f32.gmra.mxu0 %v238
    %v659 = vpop.f32.mrf.mxu0
    %v660 = vadd.f32 0.0, %v659
    %v661 = vpop.f32.mrf.mxu0
    %662 = vmatprep.mubr.f32.mxu0 0.0
    %663 = vmatmul.mubr.f32.gmra.mxu0 %v241
    %v664 = vpop.f32.mrf.mxu0
    %v665 = vadd.f32 0.0, %v664
    %v666 = vpop.f32.mrf.mxu0
    %667 = vdwg.mxu0
    %668 = vmatprep.subr.mxu0 0.0
    %669 = vmatpush1.msra.mxu0 0.0
    %670 = vmatprep.subr.mxu0 0.0
    %671 = vmatpush1.msra.mxu0 0.0
    %672 = vmatprep.subr.mxu0 0.0
    %673 = vmatpush1.msra.mxu0 0.0
    %674 = vmatprep.subr.mxu0 0.0
    %675 = vmatpush1.msra.mxu0 0.0
    %676 = vmatprep.subr.mxu0 0.0
    %677 = vmatpush1.msra.mxu0 0.0
    %678 = vmatprep.subr.mxu0 0.0
    %679 = vmatpush1.msra.mxu0 0.0
    %680 = vmatprep.subr.mxu0 0.0
    %681 = vmatpush1.msra.mxu0 0.0
    %682 = vmatprep.subr.mxu0 0.0
    %683 = vmatpush1.msra.mxu0 0.0
    %684 = vmatprep.subr.mxu0 0.0
    %685 = vmatpush1.msra.mxu0 0.0
    %686 = vmatprep.subr.mxu0 0.0
    %687 = vmatpush1.msra.mxu0 0.0
    %688 = vmatprep.subr.mxu0 0.0
    %689 = vmatpush1.msra.mxu0 0.0
    %690 = vmatprep.subr.mxu0 0.0
    %691 = vmatpush1.msra.mxu0 0.0
    %692 = vmatprep.subr.mxu0 0.0
    %693 = vmatpush1.msra.mxu0 0.0
    %694 = vmatprep.subr.mxu0 0.0
    %695 = vmatpush1.msra.mxu0 0.0
    %696 = vmatprep.subr.mxu0 0.0
    %697 = vmatpush1.msra.mxu0 %v204
    %698 = vmatprep.subr.mxu0 0.0
    %699 = vmatpush1.msra.mxu0 %v199
    %700 = vmatprep.subr.mxu0 0.0
    %701 = vmatpush2.msra.mxu0 0.0
    %702 = vmatprep.subr.mxu0 0.0
    %703 = vmatpush2.msra.mxu0 0.0
    %704 = vmatprep.subr.mxu0 0.0
    %705 = vmatpush2.msra.mxu0 0.0
    %706 = vmatprep.subr.mxu0 0.0
    %707 = vmatpush2.msra.mxu0 0.0
    %708 = vmatprep.subr.mxu0 0.0
    %709 = vmatpush2.msra.mxu0 0.0
    %710 = vmatprep.subr.mxu0 0.0
    %711 = vmatpush2.msra.mxu0 0.0
    %712 = vmatprep.subr.mxu0 0.0
    %713 = vmatpush2.msra.mxu0 0.0
    %714 = vmatprep.subr.mxu0 0.0
    %715 = vmatpush2.msra.mxu0 0.0
    %716 = vmatprep.subr.mxu0 0.0
    %717 = vmatpush2.msra.mxu0 0.0
    %718 = vmatprep.subr.mxu0 0.0
    %719 = vmatpush2.msra.mxu0 0.0
    %720 = vmatprep.subr.mxu0 0.0
    %721 = vmatpush2.msra.mxu0 0.0
    %722 = vmatprep.subr.mxu0 0.0
    %723 = vmatpush2.msra.mxu0 0.0
    %724 = vmatprep.subr.mxu0 0.0
    %725 = vmatpush2.msra.mxu0 0.0
    %726 = vmatprep.subr.mxu0 0.0
    %727 = vmatpush2.msra.mxu0 0.0
    %728 = vmatprep.subr.mxu0 0.0
    %729 = vmatpush2.msra.mxu0 0.0
    %730 = vmatprep.subr.mxu0 0.0
    %731 = vmatpush2.msra.mxu0 0.0
    %732 = vmatprep.mubr.f32.mxu0 0.0
    %733 = vmatmul.mubr.f32.gmra.mxu0 %v232
    %v734 = vpop.f32.mrf.mxu0
    %v735 = vadd.f32 0.0, %v734
    %v736 = vpop.f32.mrf.mxu0
    %737 = vmatprep.mubr.f32.mxu0 0.0
    %738 = vmatmul.mubr.f32.gmra.mxu0 %v235
    %v739 = vpop.f32.mrf.mxu0
    %v740 = vadd.f32 0.0, %v739
    %v741 = vpop.f32.mrf.mxu0
    %742 = vmatprep.mubr.f32.mxu0 0.0
    %743 = vmatmul.mubr.f32.gmra.mxu0 %v238
    %v744 = vpop.f32.mrf.mxu0
    %v745 = vadd.f32 0.0, %v744
    %v746 = vpop.f32.mrf.mxu0
    %747 = vmatprep.mubr.f32.mxu0 0.0
    %748 = vmatmul.mubr.f32.gmra.mxu0 %v241
    %v749 = vpop.f32.mrf.mxu0
    %v750 = vadd.f32 0.0, %v749
    %v751 = vpop.f32.mrf.mxu0
    %752 = vdwg.mxu0
    %753 = vmatprep.subr.mxu0 0.0
    %754 = vmatpush1.msra.mxu0 0.0
    %755 = vmatprep.subr.mxu0 0.0
    %756 = vmatpush1.msra.mxu0 0.0
    %757 = vmatprep.subr.mxu0 0.0
    %758 = vmatpush1.msra.mxu0 0.0
    %759 = vmatprep.subr.mxu0 0.0
    %760 = vmatpush1.msra.mxu0 0.0
    %761 = vmatprep.subr.mxu0 0.0
    %762 = vmatpush1.msra.mxu0 0.0
    %763 = vmatprep.subr.mxu0 0.0
    %764 = vmatpush1.msra.mxu0 0.0
    %765 = vmatprep.subr.mxu0 0.0
    %766 = vmatpush1.msra.mxu0 0.0
    %767 = vmatprep.subr.mxu0 0.0
    %768 = vmatpush1.msra.mxu0 0.0
    %769 = vmatprep.subr.mxu0 0.0
    %770 = vmatpush1.msra.mxu0 0.0
    %771 = vmatprep.subr.mxu0 0.0
    %772 = vmatpush1.msra.mxu0 0.0
    %773 = vmatprep.subr.mxu0 0.0
    %774 = vmatpush1.msra.mxu0 0.0
    %775 = vmatprep.subr.mxu0 0.0
    %776 = vmatpush1.msra.mxu0 0.0
    %777 = vmatprep.subr.mxu0 0.0
    %778 = vmatpush1.msra.mxu0 0.0
    %779 = vmatprep.subr.mxu0 0.0
    %780 = vmatpush1.msra.mxu0 0.0
    %781 = vmatprep.subr.mxu0 0.0
    %782 = vmatpush1.msra.mxu0 %v214
    %783 = vmatprep.subr.mxu0 0.0
    %784 = vmatpush1.msra.mxu0 %v209
    %785 = vmatprep.subr.mxu0 0.0
    %786 = vmatpush2.msra.mxu0 0.0
    %787 = vmatprep.subr.mxu0 0.0
    %788 = vmatpush2.msra.mxu0 0.0
    %789 = vmatprep.subr.mxu0 0.0
    %790 = vmatpush2.msra.mxu0 0.0
    %791 = vmatprep.subr.mxu0 0.0
    %792 = vmatpush2.msra.mxu0 0.0
    %793 = vmatprep.subr.mxu0 0.0
    %794 = vmatpush2.msra.mxu0 0.0
    %795 = vmatprep.subr.mxu0 0.0
    %796 = vmatpush2.msra.mxu0 0.0
    %797 = vmatprep.subr.mxu0 0.0
    %798 = vmatpush2.msra.mxu0 0.0
    %799 = vmatprep.subr.mxu0 0.0
    %800 = vmatpush2.msra.mxu0 0.0
    %801 = vmatprep.subr.mxu0 0.0
    %802 = vmatpush2.msra.mxu0 0.0
    %803 = vmatprep.subr.mxu0 0.0
    %804 = vmatpush2.msra.mxu0 0.0
    %805 = vmatprep.subr.mxu0 0.0
    %806 = vmatpush2.msra.mxu0 0.0
    %807 = vmatprep.subr.mxu0 0.0
    %808 = vmatpush2.msra.mxu0 0.0
    %809 = vmatprep.subr.mxu0 0.0
    %810 = vmatpush2.msra.mxu0 0.0
    %811 = vmatprep.subr.mxu0 0.0
    %812 = vmatpush2.msra.mxu0 0.0
    %813 = vmatprep.subr.mxu0 0.0
    %814 = vmatpush2.msra.mxu0 0.0
    %815 = vmatprep.subr.mxu0 0.0
    %816 = vmatpush2.msra.mxu0 0.0
    %817 = vmatprep.mubr.f32.mxu0 0.0
    %818 = vmatmul.mubr.f32.gmra.mxu0 %v232
    %v819 = vpop.f32.mrf.mxu0
    %v820 = vadd.f32 0.0, %v819
    %v821 = vpop.f32.mrf.mxu0
    %822 = vmatprep.mubr.f32.mxu0 0.0
    %823 = vmatmul.mubr.f32.gmra.mxu0 %v235
    %v824 = vpop.f32.mrf.mxu0
    %v825 = vadd.f32 0.0, %v824
    %v826 = vpop.f32.mrf.mxu0
    %827 = vmatprep.mubr.f32.mxu0 0.0
    %828 = vmatmul.mubr.f32.gmra.mxu0 %v238
    %v829 = vpop.f32.mrf.mxu0
    %v830 = vadd.f32 0.0, %v829
    %v831 = vpop.f32.mrf.mxu0
    %832 = vmatprep.mubr.f32.mxu0 0.0
    %833 = vmatmul.mubr.f32.gmra.mxu0 %v241
    %v834 = vpop.f32.mrf.mxu0
    %v835 = vadd.f32 0.0, %v834
    %v836 = vpop.f32.mrf.mxu0
    %837 = vdwg.mxu0
    %838 = vmatprep.subr.mxu0 0.0
    %839 = vmatpush1.msra.mxu0 0.0
    %840 = vmatprep.subr.mxu0 0.0
    %841 = vmatpush1.msra.mxu0 0.0
    %842 = vmatprep.subr.mxu0 0.0
    %843 = vmatpush1.msra.mxu0 0.0
    %844 = vmatprep.subr.mxu0 0.0
    %845 = vmatpush1.msra.mxu0 0.0
    %846 = vmatprep.subr.mxu0 0.0
    %847 = vmatpush1.msra.mxu0 0.0
    %848 = vmatprep.subr.mxu0 0.0
    %849 = vmatpush1.msra.mxu0 0.0
    %850 = vmatprep.subr.mxu0 0.0
    %851 = vmatpush1.msra.mxu0 0.0
    %852 = vmatprep.subr.mxu0 0.0
    %853 = vmatpush1.msra.mxu0 0.0
    %854 = vmatprep.subr.mxu0 0.0
    %855 = vmatpush1.msra.mxu0 0.0
    %856 = vmatprep.subr.mxu0 0.0
    %857 = vmatpush1.msra.mxu0 0.0
    %858 = vmatprep.subr.mxu0 0.0
    %859 = vmatpush1.msra.mxu0 0.0
    %860 = vmatprep.subr.mxu0 0.0
    %861 = vmatpush1.msra.mxu0 0.0
    %862 = vmatprep.subr.mxu0 0.0
    %863 = vmatpush1.msra.mxu0 0.0
    %864 = vmatprep.subr.mxu0 0.0
    %865 = vmatpush1.msra.mxu0 0.0
    %866 = vmatprep.subr.mxu0 0.0
    %867 = vmatpush1.msra.mxu0 %v224
    %868 = vmatprep.subr.mxu0 0.0
    %869 = vmatpush1.msra.mxu0 %v219
    %870 = vmatprep.subr.mxu0 0.0
    %871 = vmatpush2.msra.mxu0 0.0
    %872 = vmatprep.subr.mxu0 0.0
    %873 = vmatpush2.msra.mxu0 0.0
    %874 = vmatprep.subr.mxu0 0.0
    %875 = vmatpush2.msra.mxu0 0.0
    %876 = vmatprep.subr.mxu0 0.0
    %877 = vmatpush2.msra.mxu0 0.0
    %878 = vmatprep.subr.mxu0 0.0
    %879 = vmatpush2.msra.mxu0 0.0
    %880 = vmatprep.subr.mxu0 0.0
    %881 = vmatpush2.msra.mxu0 0.0
    %882 = vmatprep.subr.mxu0 0.0
    %883 = vmatpush2.msra.mxu0 0.0
    %884 = vmatprep.subr.mxu0 0.0
    %885 = vmatpush2.msra.mxu0 0.0
    %886 = vmatprep.subr.mxu0 0.0
    %887 = vmatpush2.msra.mxu0 0.0
    %888 = vmatprep.subr.mxu0 0.0
    %889 = vmatpush2.msra.mxu0 0.0
    %890 = vmatprep.subr.mxu0 0.0
    %891 = vmatpush2.msra.mxu0 0.0
    %892 = vmatprep.subr.mxu0 0.0
    %893 = vmatpush2.msra.mxu0 0.0
    %894 = vmatprep.subr.mxu0 0.0
    %895 = vmatpush2.msra.mxu0 0.0
    %896 = vmatprep.subr.mxu0 0.0
    %897 = vmatpush2.msra.mxu0 0.0
    %898 = vmatprep.subr.mxu0 0.0
    %899 = vmatpush2.msra.mxu0 0.0
    %900 = vmatprep.subr.mxu0 0.0
    %901 = vmatpush2.msra.mxu0 0.0
    %902 = vmatprep.mubr.f32.mxu0 0.0
    %903 = vmatmul.mubr.f32.gmra.mxu0 %v232
    %v904 = vpop.f32.mrf.mxu0
    %v905 = vadd.f32 0.0, %v904
    %v906 = vpop.f32.mrf.mxu0
    %907 = vmatprep.mubr.f32.mxu0 0.0
    %908 = vmatmul.mubr.f32.gmra.mxu0 %v235
    %v909 = vpop.f32.mrf.mxu0
    %v910 = vadd.f32 0.0, %v909
    %v911 = vpop.f32.mrf.mxu0
    %912 = vmatprep.mubr.f32.mxu0 0.0
    %913 = vmatmul.mubr.f32.gmra.mxu0 %v238
    %v914 = vpop.f32.mrf.mxu0
    %v915 = vadd.f32 0.0, %v914
    %v916 = vpop.f32.mrf.mxu0
    %917 = vmatprep.mubr.f32.mxu0 0.0
    %918 = vmatmul.mubr.f32.gmra.mxu0 %v241
    %v919 = vpop.f32.mrf.mxu0
    %v920 = vadd.f32 0.0, %v919
    %v921 = vpop.f32.mrf.mxu0
    %922 = vdwg.mxu0
    %vm923 = vcmask 261120
    %924 = vst.msk [vmem:[#allocation2] sm:$0xff] %vm923, %v310
    %925 = vst.msk [vmem:[#allocation2 + $0x8] sm:$0xff] %vm923, %v315
    %926 = vst.msk [vmem:[#allocation2 + $0x10] sm:$0xff] %vm923, %v320
    %927 = vst.msk [vmem:[#allocation2 + $0x18] sm:$0xff] %vm923, %v325
    %928 = vst.msk [vmem:[#allocation2 + $0x20] sm:$0xff] %vm923, %v395
    %929 = vst.msk [vmem:[#allocation2 + $0x28] sm:$0xff] %vm923, %v400
    %930 = vst.msk [vmem:[#allocation2 + $0x30] sm:$0xff] %vm923, %v405
    %931 = vst.msk [vmem:[#allocation2 + $0x38] sm:$0xff] %vm923, %v410
    %932 = vst.msk [vmem:[#allocation2 + $0x40] sm:$0xff] %vm923, %v480
    %933 = vst.msk [vmem:[#allocation2 + $0x48] sm:$0xff] %vm923, %v485
    %934 = vst.msk [vmem:[#allocation2 + $0x50] sm:$0xff] %vm923, %v490
    %935 = vst.msk [vmem:[#allocation2 + $0x58] sm:$0xff] %vm923, %v495
    %936 = vst.msk [vmem:[#allocation2 + $0x60] sm:$0xff] %vm923, %v565
    %937 = vst.msk [vmem:[#allocation2 + $0x68] sm:$0xff] %vm923, %v570
    %938 = vst.msk [vmem:[#allocation2 + $0x70] sm:$0xff] %vm923, %v575
    %939 = vst.msk [vmem:[#allocation2 + $0x78] sm:$0xff] %vm923, %v580
    %940 = vst.msk [vmem:[#allocation2 + $0x80] sm:$0xff] %vm923, %v650
    %941 = vst.msk [vmem:[#allocation2 + $0x88] sm:$0xff] %vm923, %v655
    %942 = vst.msk [vmem:[#allocation2 + $0x90] sm:$0xff] %vm923, %v660
    %943 = vst.msk [vmem:[#allocation2 + $0x98] sm:$0xff] %vm923, %v665
    %944 = vst.msk [vmem:[#allocation2 + $0xa0] sm:$0xff] %vm923, %v735
    %945 = vst.msk [vmem:[#allocation2 + $0xa8] sm:$0xff] %vm923, %v740
    %946 = vst.msk [vmem:[#allocation2 + $0xb0] sm:$0xff] %vm923, %v745
    %947 = vst.msk [vmem:[#allocation2 + $0xb8] sm:$0xff] %vm923, %v750
    %948 = vst.msk [vmem:[#allocation2 + $0xc0] sm:$0xff] %vm923, %v820
    %949 = vst.msk [vmem:[#allocation2 + $0xc8] sm:$0xff] %vm923, %v825
    %950 = vst.msk [vmem:[#allocation2 + $0xd0] sm:$0xff] %vm923, %v830
    %951 = vst.msk [vmem:[#allocation2 + $0xd8] sm:$0xff] %vm923, %v835
    %952 = vst.msk [vmem:[#allocation2 + $0xe0] sm:$0xff] %vm923, %v905
    %953 = vst.msk [vmem:[#allocation2 + $0xe8] sm:$0xff] %vm923, %v910
    %954 = vst.msk [vmem:[#allocation2 + $0xf0] sm:$0xff] %vm923, %v915
    %955 = vst.msk [vmem:[#allocation2 + $0xf8] sm:$0xff] %vm923, %v920
    // Predicated region
    $region14: #{tpu_custom_call.1} parent=1 // pred_check
      _
    $region15: #{tpu_custom_call.1} parent=1 // pred_check_branch
      %957 = sbr.rel (0) target = $region17
    $region16: #{tpu_custom_call.1} parent=1 // pred_region
      %s959 = ssub.s32 4096, 4096
      %960 = vsyncadd [#allocation3], %s959
      %s961 = sshll.u32 [#allocation2], 4
      %s962 = int_to_ptr.vmem [resolvable:$true] %s961
      %967 = dma.vmem_to_hbm [thread:$0]  %s962, 4096, %s3, [#allocation3], 128, 128, 8
    $region17: #{tpu_custom_call.1} parent=1 // pred_fallthru
      _
    // Predicated region
    $region18: #{tpu_custom_call.1} parent=1 // pred_check
      _
    $region19: #{tpu_custom_call.1} parent=1 // pred_check_branch
      %969 = sbr.rel (0) target = $region21
    $region20: #{tpu_custom_call.1} parent=1 // pred_region
      %970 = dma.done [#allocation3], 4096
    $region21: #{tpu_custom_call.1} parent=1 // pred_fallthru
      _
    %971 = vsyncpa [#allocation3], 1

</llo_original>
